<compile_context>
chip_gen: v6e
topology: v6e:2x2x1
jax: 0.10.0
libtpu: 0.0.40
codegen_flags: <defaults>
</compile_context>

<pallas_src>
import math
from functools import partial

import jax
import jax.numpy as jnp
from jax.experimental import pallas as pl
from jax.experimental.pallas import tpu as pltpu


_LANES = 128
# Minimum sublane tile per element size: f32 -> 8, bf16/f16 -> 16, int8/fp8 -> 32.
_MIN_SUBLANE = {4: 8, 2: 16, 1: 32}


def _vmem_capacity_bytes():
    try:
        return int(pltpu.get_tpu_info().vmem_capacity_bytes)
    except Exception:
        return 64 << 20  # conservative floor (v7x per-core physical VMEM)


def _plan_tiles(total_elems, itemsizes):
    """Pick (tile_rows, padded_rows) for a lane-dense (rows, 128) slab.

    itemsizes: element sizes of every operand AND the output.
    """
    itemsize = max(itemsizes)
    min_sub = max(_MIN_SUBLANE.get(i, 8) for i in itemsizes)
    rows = -(-total_elems // _LANES)                      # ceil
    n_bufs = 2 * len(itemsizes)                           # double-buffered operands + out
    # Per-block budget: ~2-4 MiB hits the HBM roofline; keep the total of all
    # double-buffered blocks well inside the scoped VMEM limit on every generation.
    scoped_cap = min(_vmem_capacity_bytes() // 2, 32 << 20)
    per_block = min(4 << 20, scoped_cap // (2 * n_bufs))  # 2x headroom
    per_block = max(per_block, min_sub * _LANES * itemsize)
    max_rows = max(min_sub, (per_block // (_LANES * itemsize)) // min_sub * min_sub)

    if rows <= min_sub:
        tile = min_sub
    else:
        # Prefer >= 2 grid steps (v7x megacore + load/compute/store overlap).
        half = -(-rows // 2)
        cap2 = max(min_sub, (half // min_sub) * min_sub)
        tile = min(max_rows, cap2)

    rows_p = -(-rows // tile) * tile                      # pad rows to a tile multiple
    return tile, rows_p


# ---------------------------------------------------------------------------
# Kernels
# ---------------------------------------------------------------------------
def _residual_fused_kernel(x_ref, o_ref, *, fn):
    x = x_ref[...]
    o_ref[...] = (fn(x) + x).astype(o_ref.dtype)


def _residual_add_kernel(y_ref, x_ref, o_ref):
    o_ref[...] = (y_ref[...] + x_ref[...]).astype(o_ref.dtype)


# ---------------------------------------------------------------------------
# Tiled launcher over a lane-dense 2-D slab
# ---------------------------------------------------------------------------
def _tiled_call(kernel, out_dtype, *arrays, alias_first_to_output=False,
                flops_per_elem=2, transcendentals_per_elem=0):
    shape = arrays[0].shape
    total = math.prod(shape)
    out_dtype = jnp.dtype(out_dtype)
    itemsizes = [jnp.dtype(a.dtype).itemsize for a in arrays] + [out_dtype.itemsize]

    tile_r, rows_p = _plan_tiles(total, itemsizes)
    padded_total = rows_p * _LANES

    def to_slab(a):
        flat = a.reshape(-1)
        if padded_total != total:
            flat = jnp.pad(flat, (0, padded_total - total))
        return flat.reshape(rows_p, _LANES)

    slabs = [to_slab(a) for a in arrays]
    spec = pl.BlockSpec((tile_r, _LANES), lambda i: (i, 0))
    # TODO(synk): optionally sweep pipeline_mode=pl.Buffered(3) on the input specs.

    block_bytes = sum(tile_r * _LANES * i for i in itemsizes)
    vmem_limit = int(min(max(4 * block_bytes, 16 << 20), _vmem_capacity_bytes() // 2))

    cost = pl.CostEstimate(
        flops=int(flops_per_elem * total),
        transcendentals=int(transcendentals_per_elem * total),
        bytes_accessed=int(sum(i * total for i in itemsizes)),
    )

    aliases = {}
    if alias_first_to_output and arrays[0].dtype == out_dtype:
        aliases = {0: 0}   # y is dead after the add -> reuse its HBM buffer as output

    out2d = pl.pallas_call(
        kernel,
        out_shape=jax.ShapeDtypeStruct((rows_p, _LANES), out_dtype),
        grid=(rows_p // tile_r,),
        in_specs=[spec] * len(slabs),
        out_specs=spec,
        input_output_aliases=aliases,
        cost_estimate=cost,
        compiler_params=pltpu.CompilerParams(
            dimension_semantics=("parallel",),
            vmem_limit_bytes=vmem_limit),
    )(*slabs)

    flat = out2d.reshape(-1)
    if padded_total != total:
        flat = flat[:total]
    return flat.reshape(shape)


# ---------------------------------------------------------------------------
# Residual module
# ---------------------------------------------------------------------------
def residual_fused(fn, x, *, transcendental=True):
    """out = fn(x) + x, with `fn` fused inside one Pallas kernel.
    `fn` must be elementwise / tile-local (it is applied to a reshaped, padded view)."""
    return _tiled_call(
        partial(_residual_fused_kernel, fn=fn), x.dtype, x,
        flops_per_elem=4,
        transcendentals_per_elem=1 if transcendental else 0)


def residual_add(y, x):
    """out = y + x as a Pallas kernel (dtype-promoting, y's buffer aliased to the output)."""
    assert y.shape == x.shape, (y.shape, x.shape)
    out_dtype = jnp.result_type(y.dtype, x.dtype)
    return _tiled_call(_residual_add_kernel, out_dtype, y, x,
                       alias_first_to_output=True, flops_per_elem=1)


class Residual:
    """Pallas port of the PyTorch `Residual` module: __call__(x, ...) = fn(x, ...) + x.

    elementwise_fn=True  -> fn is fused into a single Pallas kernel (one HBM pass).
    elementwise_fn=False -> fn runs as ordinary JAX; by default the residual add is a
                            plain JAX add so XLA fuses it into fn's producer (no extra
                            HBM round trip).  Set pallas_add=True to force the Pallas add.
    """

    def __init__(self, fn, elementwise_fn=False, pallas_add=False):
        self.fn = fn
        self.elementwise_fn = elementwise_fn
        self.pallas_add = pallas_add

    def __call__(self, x, *args, **kwargs):
        if self.elementwise_fn:
            return residual_fused(lambda t: self.fn(t, *args, **kwargs), x)
        # TODO(synk): arbitrary nn.Module `fn` bodies are not lowered into the kernel;
        # they run as ordinary JAX.  The add is left to XLA fusion (cheapest) unless
        # pallas_add=True, in which case the Pallas add (with y->out aliasing) is used.
        y = self.fn(x, *args, **kwargs)
        if self.pallas_add:
            return residual_add(y, x)
        return y + x


# ---------------------------------------------------------------------------
if __name__ == "__main__":
    key = jax.random.PRNGKey(0)
    kx, kw = jax.random.split(key)

    B, C, H, W = 2, 4, 16, 16
    x = jax.random.normal(kx, (B, C, H, W), jnp.float32)

    # Case 1: elementwise fn, fully fused into a single Pallas kernel (f32).
    fn_elem = lambda t: jax.nn.silu(t) * 1.5
    res1 = Residual(fn_elem, elementwise_fn=True)
    out1 = jax.block_until_ready(res1(x))
    ref1 = fn_elem(x) + x
    assert out1.shape == x.shape, (out1.shape, x.shape)
    assert jnp.allclose(out1, ref1, atol=1e-5, rtol=1e-5), float(jnp.abs(out1 - ref1).max())

    # Case 1b: bf16 input (exercises dtype-aware min sublane tile = 16).
    xb = x.astype(jnp.bfloat16)
    out1b = jax.block_until_ready(res1(xb))
    ref1b = fn_elem(xb) + xb
    assert out1b.dtype == jnp.bfloat16
    assert jnp.allclose(out1b.astype(jnp.float32), ref1b.astype(jnp.float32),
                        atol=2e-2, rtol=2e-2)

    # Case 1c: awkward shape (not a multiple of 128 elements) -> padded lane-dense slab.
    xo = jax.random.normal(kw, (3, 5, 7), jnp.float32)
    out1c = jax.block_until_ready(res1(xo))
    ref1c = fn_elem(xo) + xo
    assert out1c.shape == xo.shape
    assert jnp.allclose(out1c, ref1c, atol=1e-5, rtol=1e-5)

    # Case 2: arbitrary shape-preserving fn (channel mixing); add left to XLA fusion.
    w = jax.random.normal(kw, (C, C), jnp.float32) * (1.0 / math.sqrt(C))
    fn_mix = lambda t: jnp.einsum("oc,bchw->bohw", w, t)
    res2 = Residual(fn_mix)
    out2 = jax.block_until_ready(res2(x))
    ref2 = fn_mix(x) + x
    assert out2.shape == x.shape, (out2.shape, x.shape)
    assert jnp.allclose(out2, ref2, atol=1e-4, rtol=1e-4), float(jnp.abs(out2 - ref2).max())

    # Case 3: standalone Pallas residual add (with y->out aliasing), validated directly.
    y = fn_mix(x)
    out3 = jax.block_until_ready(residual_add(y, x))
    assert jnp.allclose(out3, ref2, atol=1e-4, rtol=1e-4), float(jnp.abs(out3 - ref2).max())

    print("KERNEL_OK")
</pallas_src>

<mosaic_0001>
module attributes {stable_mosaic.version = 11 : i64} {
  func.func @_residual_fused_kernel(%arg0: i32, %arg1: memref<8x128xf32, #tpu.memory_space<vmem>>, %arg2: memref<8x128xf32, #tpu.memory_space<vmem>>) attributes {dimension_semantics = [#tpu.dimension_semantics<parallel>], iteration_bounds = array<i64: 2>, scalar_prefetch = 0 : i64, scratch_operands = 0 : i64, tpu.core_type = #tpu.core_type<tc>, window_params = [{transform_indices = @transform_0, window_bounds = array<i64: 8, 128>}, {transform_indices = @transform_1, window_bounds = array<i64: 8, 128>}]} {
    %c0 = arith.constant 0 : index
    %c0_0 = arith.constant 0 : index
    %0 = vector.load %arg1[%c0, %c0_0] : memref<8x128xf32, #tpu.memory_space<vmem>>, vector<8x128xf32>
    %1 = arith.negf %0 : vector<8x128xf32>
    %2 = math.exp %1 : vector<8x128xf32>
    %cst = arith.constant 1.000000e+00 : f32
    %3 = vector.broadcast %cst : f32 to vector<8x128xf32>
    %4 = arith.addf %3, %2 : vector<8x128xf32>
    %5 = arith.divf %3, %4 : vector<8x128xf32>
    %6 = arith.mulf %0, %5 : vector<8x128xf32>
    %cst_1 = arith.constant 1.500000e+00 : f32
    %7 = vector.broadcast %cst_1 : f32 to vector<8x128xf32>
    %8 = arith.mulf %6, %7 : vector<8x128xf32>
    %9 = arith.addf %8, %0 : vector<8x128xf32>
    %c0_2 = arith.constant 0 : index
    %c0_3 = arith.constant 0 : index
    %10 = vector.load %arg2[%c0_2, %c0_3] : memref<8x128xf32, #tpu.memory_space<vmem>>, vector<8x128xf32>
    tpu.vector_store %arg2[%c0_2, %c0_3], %9 {strides = array<i32>} : memref<8x128xf32, #tpu.memory_space<vmem>>, vector<8x128xf32>,
    return
  }
  func.func @transform_0(%arg0: i32) -> (i32, i32) {
    %c0_i32 = arith.constant 0 : i32
    %c0_i32_0 = arith.constant 0 : i32
    return %arg0, %c0_i32 : i32, i32
  }
  func.func @transform_1(%arg0: i32) -> (i32, i32) {
    %c0_i32 = arith.constant 0 : i32
    %c0_i32_0 = arith.constant 0 : i32
    return %arg0, %c0_i32 : i32, i32
  }
}

</mosaic_0001>

<llo_original>
// kernel: tpu_custom_call.1
$region0: #{tpu_custom_call.1}
  #allocation0 [shape = 'u32[]', space=smem, size = 0x4, offset = 0x4, fixed_abs, tag = 'smem constant byte address 0x4 - core index']
  #allocation1 [shape = 'u32[144,128]{1,0:T(1,128)}', space=vmem, size = 0x12000, scoped, tag = 'internal scratch']
  %s0 = inlined_call_operand.hbm [shape: f32[16,128], index: 0, kind: input, shape index: {}]
  %s1 = inlined_call_operand.hbm [shape: f32[16,128], index: 1, kind: output, shape index: {}]
  %s2 = sld [smem:[#allocation0]]
  $region41: #{tpu_custom_call.1} parent=0
    _
  %s4 = ssub.s32 1, %s2
  %s5 = scalar_select 0, %s4, %s2
  $region1: #{tpu_custom_call.1} parent=0
    #allocation2 [shape = 'u8[8192]{0}', space=vmem, size = 0x2000, scoped, tag = 'input window, operand 0']
    #allocation3 [shape = 's32[2]{0}', space=sflag, size = 0x8, scoped, tag = 'scoped memory for tpu_custom_call.1']
    #allocation4 [shape = 's32[2]{0}', space=sflag, size = 0x8, scoped, tag = 'scoped memory for tpu_custom_call.1']
    #allocation5 [shape = 'u8[8192]{0}', space=vmem, size = 0x2000, scoped, tag = 'output window, operand 0']
    %6 = vsyncpa [#allocation3], 0
    %s7 = scalar_lea.sflag [#allocation3], 1
    %8 = vsyncpa %s7, 0
    %9 = vsyncpa [#allocation4], 0
    %s10 = scalar_lea.sflag [#allocation4], 1
    %11 = vsyncpa %s10, 0
    loop: start=0, step=1, limit=4
    $region2: #{tpu_custom_call.1} parent=1 // loop_pre_header
      _
    $region3: #{tpu_custom_call.1} parent=1 // loop_header
      %s13 = sphi 0, %s17
      %p14 = scmp.ge.s32.totalorder %s13, 4
      %s23 = sphi 0, %s25
      %s26 = sphi 0, %s23
      %s27 = sphi 0, %s26
      %s43 = sphi 0, %s27
      %s49 = sphi 0, %s51
      %s52 = sphi 0, %s49
      %s53 = sphi 0, %s52
      %s69 = sphi 0, %s53
    $region4: #{tpu_custom_call.1} parent=1 // loop_header_branch
      %16 = sbr.rel (%p14) target = $region8
    $region5: #{tpu_custom_call.1} parent=1 // loop_body
      %s18 = ssub.s32 %s13, 1
      %s19 = ssub.s32 %s13, 2
      %s20 = sadd.s32 %s13, 1
      %s21 = ssub.s32 %s13, %s20
      %p22 = scmp.eq.s32.totalorder %s21, 0
      %s24 = sadd.s32 %s23, 1
      %s25 = scalar_select %p22, %s23, %s24
      %p28 = pneg %p22
      %p29 = scmp.eq.s32.totalorder %s13, 1
      %p30 = por %p28, %p29
      %p31 = scmp.ne.s32.totalorder %s23, %s26
      %p32 = scmp.eq.s32.totalorder %s13, 0
      %p33 = por %p31, %p32
      %p34 = scmp.ne.s32.totalorder %s23, %s26
      %p35 = scmp.eq.s32.totalorder %s18, 1
      %p36 = por %p34, %p35
      %p37 = scmp.ne.s32.totalorder %s26, %s27
      %p38 = scmp.eq.s32.totalorder %s18, 0
      %p39 = por %p37, %p38
      %p40 = scmp.ne.s32.totalorder %s26, %s27
      %p41 = scmp.eq.s32.totalorder %s19, 1
      %p42 = por %p40, %p41
      %p44 = scmp.ne.s32.totalorder %s27, %s43
      %p45 = scmp.eq.s32.totalorder %s19, 0
      %p46 = por %p44, %p45
      %s47 = ssub.s32 %s13, %s20
      %p48 = scmp.eq.s32.totalorder %s47, 0
      %s50 = sadd.s32 %s49, 1
      %s51 = scalar_select %p48, %s49, %s50
      %p54 = pneg %p48
      %p55 = scmp.eq.s32.totalorder %s13, 1
      %p56 = por %p54, %p55
      %p57 = scmp.ne.s32.totalorder %s49, %s52
      %p58 = scmp.eq.s32.totalorder %s13, 0
      %p59 = por %p57, %p58
      %p60 = scmp.ne.s32.totalorder %s49, %s52
      %p61 = scmp.eq.s32.totalorder %s18, 1
      %p62 = por %p60, %p61
      %p63 = scmp.ne.s32.totalorder %s52, %s53
      %p64 = scmp.eq.s32.totalorder %s18, 0
      %p65 = por %p63, %p64
      %p66 = scmp.ne.s32.totalorder %s52, %s53
      %p67 = scmp.eq.s32.totalorder %s19, 1
      %p68 = por %p66, %p67
      %p70 = scmp.ne.s32.totalorder %s53, %s69
      %p71 = scmp.eq.s32.totalorder %s19, 0
      %p72 = por %p70, %p71
      %p73 = scmp.le.s32.totalorder 1, %s13
      %p74 = scmp.lt.s32.totalorder %s13, 3
      %p75 = pnand %p73, %p74
      %p76 = pneg %p75
      // Predicated region
      $region9: #{tpu_custom_call.1} parent=5 // pred_check
        _
      $region10: #{tpu_custom_call.1} parent=5 // pred_check_branch
        %78 = sbr.rel (%p75) target = $region12
      $region11: #{tpu_custom_call.1} parent=5 // pred_region
        %s79 = ssub.s32 %s13, 1
      $region12: #{tpu_custom_call.1} parent=5 // pred_fallthru
        _
      %p80 = scmp.lt.s32.totalorder %s13, 2
      // Predicated region
      $region13: #{tpu_custom_call.1} parent=5 // pred_check
        %p81 = pneg %p80
      $region14: #{tpu_custom_call.1} parent=5 // pred_check_branch
        %83 = sbr.rel (%p81) target = $region16
      $region15: #{tpu_custom_call.1} parent=5 // pred_region
        // Predicated region
        $region17: #{tpu_custom_call.1} parent=15 // pred_check
          %p84 = pneg %p33
        $region18: #{tpu_custom_call.1} parent=15 // pred_check_branch
          %86 = sbr.rel (%p84) target = $region20
        $region19: #{tpu_custom_call.1} parent=15 // pred_region
          %s87 = sand.u32 %s23, 1
          %s88 = scalar_lea.sflag [#allocation3], %s87
          %s89 = sand.u32 %s23, 1
          %s90 = smul.addr %s89, 8
          %s91 = scalar_lea.vmem [#allocation2], %s90
          %s93 = ssub.s32 128, 128
          %94 = vsyncadd %s88, %s93
          %s95 = smul.addr %s13, 128
          %s96 = scalar_lea.hbm %s0, %s95
          %s98 = sshll.u32 %s91, 4
          %s99 = int_to_ptr.vmem [resolvable:$true] %s98
          %101 = dma.hbm_to_vmem [thread:$0]  %s96, 128, %s99, %s88
        $region20: #{tpu_custom_call.1} parent=15 // pred_fallthru
          _
      $region16: #{tpu_custom_call.1} parent=5 // pred_fallthru
        _
      %p102 = scmp.le.s32.totalorder 1, %s13
      %p103 = scmp.lt.s32.totalorder %s13, 3
      %p104 = pnand %p102, %p103
      %p105 = pneg %p104
      // Predicated region
      $region21: #{tpu_custom_call.1} parent=5 // pred_check
        _
      $region22: #{tpu_custom_call.1} parent=5 // pred_check_branch
        %107 = sbr.rel (%p104) target = $region24
      $region23: #{tpu_custom_call.1} parent=5 // pred_region
        %s108 = ssub.s32 %s13, 1
        %s109 = sand.u32 %s26, 1
        %s110 = scalar_lea.sflag [#allocation3], %s109
        %s111 = sand.u32 %s26, 1
        %s112 = smul.addr %s111, 8
        %s113 = scalar_lea.vmem [#allocation2], %s112
        // Predicated region
        $region25: #{tpu_custom_call.1} parent=23 // pred_check
          %p114 = pneg %p39
        $region26: #{tpu_custom_call.1} parent=23 // pred_check_branch
          %116 = sbr.rel (%p114) target = $region28
        $region27: #{tpu_custom_call.1} parent=23 // pred_region
          %117 = dma.done %s110, 128
        $region28: #{tpu_custom_call.1} parent=23 // pred_fallthru
          _
        %s118 = sand.u32 %s26, 1
        %s119 = scalar_lea.sflag [#allocation3], %s118
        %s120 = sand.u32 %s26, 1
        %s121 = smul.addr %s120, 8
        %s122 = scalar_lea.vmem [#allocation2], %s121
        %p123 = pneg %p39
        %p124 = pneg %p36
        %p125 = pneg %p65
        %p126 = pneg %p62
        %s127 = sand.u32 %s52, 1
        %s128 = scalar_lea.sflag [#allocation4], %s127
        %s129 = sand.u32 %s52, 1
        %s130 = smul.addr %s129, 8
        %s131 = scalar_lea.vmem [#allocation5], %s130
        %v132 = vld [vmem:[%s113] sm:$0xff]
        %v133 = vxor.u32 %v132, 2147483648
        %v134 = vmul.f32 %v133, 1.442695
        %v135 = vpow.pop %v134
        %v136 = vadd.f32 %v135, 1.0
        %v137 = vrcp.pop %v136
        %v138 = vmul.f32 1.0, %v137
        %v139 = vmul.f32 %v132, %v138
        %v140 = vmul.f32 %v139, 1.5
        %v141 = vadd.f32 %v140, %v132
        %142 = vst [vmem:[%s131] sm:$0xff] %v141
        %s143 = sand.u32 %s52, 1
        %s144 = scalar_lea.sflag [#allocation4], %s143
        %s145 = sand.u32 %s52, 1
        %s146 = smul.addr %s145, 8
        %s147 = scalar_lea.vmem [#allocation5], %s146
        // Predicated region
        $region29: #{tpu_custom_call.1} parent=23 // pred_check
          %p148 = pneg %p62
        $region30: #{tpu_custom_call.1} parent=23 // pred_check_branch
          %150 = sbr.rel (%p148) target = $region32
        $region31: #{tpu_custom_call.1} parent=23 // pred_region
          %s152 = ssub.s32 128, 128
          %153 = vsyncadd %s144, %s152
          %s154 = smul.addr %s18, 128
          %s155 = scalar_lea.hbm %s1, %s154
          %s157 = sshll.u32 %s147, 4
          %s158 = int_to_ptr.vmem [resolvable:$true] %s157
          %160 = dma.vmem_to_hbm [thread:$0]  %s158, 128, %s155, %s144
        $region32: #{tpu_custom_call.1} parent=23 // pred_fallthru
          _
      $region24: #{tpu_custom_call.1} parent=5 // pred_fallthru
        _
      %p161 = scmp.le.s32.totalorder 2, %s13
      // Predicated region
      $region33: #{tpu_custom_call.1} parent=5 // pred_check
        %p162 = pneg %p161
      $region34: #{tpu_custom_call.1} parent=5 // pred_check_branch
        %164 = sbr.rel (%p162) target = $region36
      $region35: #{tpu_custom_call.1} parent=5 // pred_region
        %s165 = ssub.s32 %s13, 2
        // Predicated region
        $region37: #{tpu_custom_call.1} parent=35 // pred_check
          %p166 = pneg %p68
        $region38: #{tpu_custom_call.1} parent=35 // pred_check_branch
          %168 = sbr.rel (%p166) target = $region40
        $region39: #{tpu_custom_call.1} parent=35 // pred_region
          %s169 = sand.u32 %s53, 1
          %s170 = scalar_lea.sflag [#allocation4], %s169
          %s171 = sand.u32 %s53, 1
          %s172 = smul.addr %s171, 8
          %s173 = scalar_lea.vmem [#allocation5], %s172
          %174 = dma.done %s170, 128
        $region40: #{tpu_custom_call.1} parent=35 // pred_fallthru
          _
      $region36: #{tpu_custom_call.1} parent=5 // pred_fallthru
        _
    $region6: #{tpu_custom_call.1} parent=1 // loop_footer
      %s17 = sadd.s32 1, %s13
    $region7: #{tpu_custom_call.1} parent=1 // loop_footer_branch
      %12 = sbr.rel target = $region3
    $region8: #{tpu_custom_call.1} parent=1 // loop_exit
      _
    %175 = vsyncpa [#allocation3], 1
    %s176 = scalar_lea.sflag [#allocation3], 1
    %177 = vsyncpa %s176, 1
    %178 = vsyncpa [#allocation4], 1
    %s179 = scalar_lea.sflag [#allocation4], 1
    %180 = vsyncpa %s179, 1

</llo_original>
